<compile_context>
chip_gen: v7x
topology: tpu7x:2x2x1
jax: 0.10.0
libtpu: 0.0.40
codegen_flags: <defaults>
</compile_context>

<pallas_src>
import jax
import jax.numpy as jnp
import numpy as np
from jax.experimental import pallas as pl
from jax.experimental.pallas import tpu as pltpu

BN_EPS = 1e-5
LANE = 128
_LATENT_LAYER_IDX = 3   # index of the latent Linear+ReLU in the packed layer list


def _round_up(d, m=LANE):
    return ((d + m - 1) // m) * m


# --------------------------------------------------------------------------- #
# Kernel
# --------------------------------------------------------------------------- #
def _make_kernel(layout, act_dtype):
    """layout: tuple of (w_row_off, in_pad, out_pad, bias_off, relu) per layer,
    all static Python ints -> every ref slice below is a free static view."""

    def kernel(x_ref, w_ref, b_ref, rec_ref, lat_ref):
        h = x_ref[...]                                   # already act_dtype, lane-dense
        n_layers = len(layout)
        for idx, (r0, din, dout, b0, relu) in enumerate(layout):
            w = w_ref[r0:r0 + din, :dout]                # static slice -> view
            acc = jnp.dot(h.astype(w.dtype), w,          # no-op cast when dtypes match
                          preferred_element_type=jnp.float32)
            acc = acc + b_ref[0:1, b0:b0 + dout]         # f32 bias (carries folded BN)
            if relu:
                acc = jnp.maximum(acc, 0.0)
            if idx == _LATENT_LAYER_IDX:
                lat_ref[...] = acc.astype(lat_ref.dtype)
            if idx == n_layers - 1:
                rec_ref[...] = acc.astype(rec_ref.dtype)
            else:
                h = acc.astype(act_dtype)                # one cast per layer

    return kernel


# --------------------------------------------------------------------------- #
# Parameter preparation (BN folding, lane padding, packing into slabs)
# --------------------------------------------------------------------------- #
def _fold_bn(w, b, bn):
    """Fold eval-mode BatchNorm1d (rows: gamma, beta, mean, var) into Linear (w, b).
    Done in f32; only the final packed slab is cast to the weight dtype."""
    scale = bn[0] * jax.lax.rsqrt(bn[3] + BN_EPS)
    return w * scale, (b - bn[2]) * scale + bn[1]


def _prepare_params(params, input_dim, latent_dim, weight_dtype):
    w1, b1 = _fold_bn(params["w1"], params["b1"], params["bn1"])
    w2, b2 = _fold_bn(params["w2"], params["b2"], params["bn2"])
    wd1, bd1 = _fold_bn(params["wd1"], params["bd1"], params["bnd1"])
    wd2, bd2 = _fold_bn(params["wd2"], params["bd2"], params["bnd2"])

    # Forward order.  seq_len == 1 => attention reduces to the V projection.
    layers = [
        (w1, b1, True),
        (w2, b2, True),
        (params["wv"], params["bv"], False),
        (params["wl"], params["bl"], True),    # latent (index _LATENT_LAYER_IDX)
        (wd1, bd1, True),
        (wd2, bd2, True),
        (params["wout"], params["bout"], False),
    ]

    padded = []
    for w, b, relu in layers:
        din, dout = w.shape
        ip, op = _round_up(din), _round_up(dout)
        wp = jnp.pad(w, ((0, ip - din), (0, op - dout)))
        bp = jnp.pad(jnp.reshape(b, (1, -1)), ((0, 0), (0, op - dout)))
        padded.append((wp, bp, relu, ip, op))

    max_cols = max(op for *_, op in padded)
    w_rows, b_cols, layout = [], [], []
    row_off = b_off = 0
    for wp, bp, relu, ip, op in padded:
        w_rows.append(jnp.pad(wp, ((0, 0), (0, max_cols - op))))
        b_cols.append(bp)
        layout.append((row_off, ip, op, b_off, relu))
        row_off += ip
        b_off += op

    w_slab = jnp.concatenate(w_rows, axis=0).astype(weight_dtype)  # (sum in_pad, max_cols)
    b_slab = jnp.concatenate(b_cols, axis=1).astype(jnp.float32)   # (1, sum out_pad)
    return w_slab, b_slab, tuple(layout), _round_up(input_dim), _round_up(latent_dim)


# --------------------------------------------------------------------------- #
# Block-size selection
# --------------------------------------------------------------------------- #
def _pick_block_b(B, max_block=512, min_rows_per_core=128):
    """Single grid step unless the batch is big enough for a split to pay off.

    v5e/v6e have one TensorCore: extra grid steps are pure per-step overhead, so the
    whole batch runs in one step for small B.  On v7x, megacore sharding only wins
    once each core gets >= min_rows_per_core rows, so we only split at B >= 2*that,
    capping blocks at max_block rows (VMEM-friendly on v7x's 64 MiB)."""
    if B < 2 * min_rows_per_core:
        return B
    for blk in range(min(B // 2, max_block), 7, -1):
        if B % blk == 0 and blk % 8 == 0:
            return blk
    return B   # no sublane-aligned divisor: one full-batch block (always legal)


# --------------------------------------------------------------------------- #
# Wrapper
# --------------------------------------------------------------------------- #
def attention_autoencoder_forward(x, params, *, block_b=None,
                                  weight_dtype=jnp.bfloat16, act_dtype=None):
    if act_dtype is None:
        act_dtype = weight_dtype
    B, input_dim = x.shape
    latent_dim = params["wl"].shape[1]

    w_slab, b_slab, layout, in_pad, lat_pad = _prepare_params(
        params, input_dim, latent_dim, weight_dtype)

    if block_b is None:
        block_b = _pick_block_b(B)
    if B % block_b != 0:
        raise ValueError(f"block_b={block_b} must divide batch size {B}")
    if block_b != B and block_b % 8 != 0:
        raise ValueError(f"block_b={block_b} must be a multiple of 8 (sublane) "
                         f"or equal the full batch {B}")

    # Lane-dense, act_dtype input (zero pad lanes are exact: matching weight rows are 0).
    x_p = x
    if in_pad != input_dim:
        x_p = jnp.pad(x_p, ((0, 0), (0, in_pad - input_dim)))
    x_p = x_p.astype(act_dtype)

    # VMEM budget from the actual footprint (params single-buffered, I/O double-buffered).
    isz = lambda dt: jnp.dtype(dt).itemsize
    footprint = (w_slab.size * isz(weight_dtype) + b_slab.size * 4
                 + 2 * block_b * in_pad * isz(act_dtype)
                 + 2 * block_b * (in_pad + lat_pad) * isz(x.dtype))
    vmem_limit = int(min(48 * 2**20, max(16 * 2**20, 2 * footprint)))

    def const_spec(p):
        # Constant index_map: DMA'd once; Buffered(1) drops the dead second buffer.
        return pl.BlockSpec(p.shape, lambda i: (0, 0), pipeline_mode=pl.Buffered(1))

    rec_p, lat_p = pl.pallas_call(
        _make_kernel(layout, act_dtype),
        out_shape=(
            jax.ShapeDtypeStruct((B, in_pad), x.dtype),
            jax.ShapeDtypeStruct((B, lat_pad), x.dtype),
        ),
        grid_spec=pltpu.PrefetchScalarGridSpec(
            num_scalar_prefetch=0,
            grid=(B // block_b,),
            in_specs=[pl.BlockSpec((block_b, in_pad), lambda i: (i, 0)),
                      const_spec(w_slab),
                      const_spec(b_slab)],
            out_specs=[pl.BlockSpec((block_b, in_pad), lambda i: (i, 0)),
                       pl.BlockSpec((block_b, lat_pad), lambda i: (i, 0))],
        ),
        compiler_params=pltpu.CompilerParams(
            dimension_semantics=("parallel",),
            vmem_limit_bytes=vmem_limit),
    )(x_p, w_slab, b_slab)

    rec = rec_p[:, :input_dim]
    lat = lat_p[:, :latent_dim]
    # seq_len == 1: softmax over a single score is exactly 1.0 (matches PyTorch).
    attn = jnp.ones((B, 1, 1), x.dtype)
    return rec, lat, attn


# --------------------------------------------------------------------------- #
# Reference model + init (for validation)
# --------------------------------------------------------------------------- #
def init_params(key, input_dim, hidden_dims, latent_dim, attention_dim):
    assert len(hidden_dims) == 2, "script is specialized to two hidden layers"
    h1, h2 = hidden_dims
    keys = iter(jax.random.split(key, 64))

    def lin(in_d, out_d):
        w = 0.1 * jax.random.normal(next(keys), (in_d, out_d), jnp.float32)
        b = 0.1 * jax.random.normal(next(keys), (1, out_d), jnp.float32)
        return w, b

    def bn(d):
        gamma = 1.0 + 0.1 * jax.random.normal(next(keys), (1, d), jnp.float32)
        beta = 0.1 * jax.random.normal(next(keys), (1, d), jnp.float32)
        mean = 0.1 * jax.random.normal(next(keys), (1, d), jnp.float32)
        var = 1.0 + 0.1 * jnp.abs(jax.random.normal(next(keys), (1, d), jnp.float32))
        return jnp.concatenate([gamma, beta, mean, var], axis=0)

    p = {}
    p["w1"], p["b1"] = lin(input_dim, h1); p["bn1"] = bn(h1)
    p["w2"], p["b2"] = lin(h1, h2);        p["bn2"] = bn(h2)
    p["wq"], p["bq"] = lin(h2, attention_dim)
    p["wk"], p["bk"] = lin(h2, attention_dim)
    p["wv"], p["bv"] = lin(h2, attention_dim)
    p["wl"], p["bl"] = lin(attention_dim, latent_dim)
    p["wd1"], p["bd1"] = lin(latent_dim, h2); p["bnd1"] = bn(h2)
    p["wd2"], p["bd2"] = lin(h2, h1);         p["bnd2"] = bn(h1)
    p["wout"], p["bout"] = lin(h1, input_dim)
    return p


def ref_forward(x, params, attention_dim):
    """Plain-JAX reference mirroring the (intended) PyTorch forward in eval mode,
    including the full Q/K/softmax path, all in f32."""
    def linear(h, w, b):
        return h @ w + b

    def bn_eval(h, bn):
        return (h - bn[2]) / jnp.sqrt(bn[3] + BN_EPS) * bn[0] + bn[1]

    h = jax.nn.relu(bn_eval(linear(x, params["w1"], params["b1"]), params["bn1"]))
    h = jax.nn.relu(bn_eval(linear(h, params["w2"], params["b2"]), params["bn2"]))
    enc = h[:, None, :]                                       # (B, 1, H2)
    q = linear(enc, params["wq"], params["bq"])
    k = linear(enc, params["wk"], params["bk"])
    v = linear(enc, params["wv"], params["bv"])
    scores = jnp.einsum("bqa,bka->bqk", q, k) / np.sqrt(attention_dim)
    w = jax.nn.softmax(scores, axis=-1)                       # (B, 1, 1) == 1.0
    attended = jnp.einsum("bqk,bka->bqa", w, v)[:, 0, :]      # (B, A)
    lat = jax.nn.relu(linear(attended, params["wl"], params["bl"]))
    d = jax.nn.relu(bn_eval(linear(lat, params["wd1"], params["bd1"]), params["bnd1"]))
    d = jax.nn.relu(bn_eval(linear(d, params["wd2"], params["bd2"]), params["bnd2"]))
    rec = linear(d, params["wout"], params["bout"])
    return rec, lat, w


if __name__ == "__main__":
    key = jax.random.PRNGKey(0)
    B, input_dim = 64, 32
    hidden_dims = [64, 32]
    latent_dim = 16
    attention_dim = 64

    pkey, xkey = jax.random.split(key)
    params = init_params(pkey, input_dim, hidden_dims, latent_dim, attention_dim)
    x = jax.random.normal(xkey, (B, input_dim), jnp.float32)

    rec_r, lat_r, attn_r = ref_forward(x, params, attention_dim)

    # f32-weight run: exact eval-mode semantics, tight tolerance.
    rec, lat, attn = attention_autoencoder_forward(x, params,
                                                   weight_dtype=jnp.float32)
    jax.block_until_ready((rec, lat, attn))
    np.testing.assert_allclose(np.asarray(rec), np.asarray(rec_r), rtol=1e-4, atol=1e-4)
    np.testing.assert_allclose(np.asarray(lat), np.asarray(lat_r), rtol=1e-4, atol=1e-4)
    np.testing.assert_allclose(np.asarray(attn), np.asarray(attn_r), rtol=1e-4, atol=1e-4)

    # bf16 weights + bf16 activations (default fast path): looser tolerance.
    rec_b, lat_b, attn_b = attention_autoencoder_forward(x, params)
    jax.block_until_ready((rec_b, lat_b, attn_b))
    np.testing.assert_allclose(np.asarray(rec_b), np.asarray(rec_r), rtol=5e-2, atol=5e-2)
    np.testing.assert_allclose(np.asarray(lat_b), np.asarray(lat_r), rtol=5e-2, atol=5e-2)
    np.testing.assert_allclose(np.asarray(attn_b), np.asarray(attn_r), rtol=1e-6, atol=1e-6)

    print("KERNEL_OK")
</pallas_src>

<mosaic_0001>
module attributes {stable_mosaic.version = 11 : i64} {
  func.func @kernel(%arg0: i32, %arg1: memref<64x128xf32, #tpu.memory_space<vmem>>, %arg2: memref<896x128xf32, #tpu.memory_space<vmem>>, %arg3: memref<1x896xf32, #tpu.memory_space<vmem>>, %arg4: memref<64x128xf32, #tpu.memory_space<vmem>>, %arg5: memref<64x128xf32, #tpu.memory_space<vmem>>) attributes {dimension_semantics = [#tpu.dimension_semantics<parallel>], iteration_bounds = array<i64: 1>, scalar_prefetch = 0 : i64, scratch_operands = 0 : i64, tpu.core_type = #tpu.core_type<tc>, window_params = [{transform_indices = @transform_0, window_bounds = array<i64: 64, 128>}, {pipeline_mode = #tpu.pipeline_mode<synchronous>, transform_indices = @transform_1, window_bounds = array<i64: 896, 128>}, {pipeline_mode = #tpu.pipeline_mode<synchronous>, transform_indices = @transform_2, window_bounds = array<i64: 1, 896>}, {transform_indices = @transform_3, window_bounds = array<i64: 64, 128>}, {transform_indices = @transform_4, window_bounds = array<i64: 64, 128>}]} {
    %c0 = arith.constant 0 : index
    %c0_0 = arith.constant 0 : index
    %0 = vector.load %arg1[%c0, %c0_0] : memref<64x128xf32, #tpu.memory_space<vmem>>, vector<64x128xf32>
    %c0_1 = arith.constant 0 : index
    %c0_2 = arith.constant 0 : index
    %1 = vector.load %arg2[%c0_1, %c0_2] : memref<896x128xf32, #tpu.memory_space<vmem>>, vector<128x128xf32>
    %cst = arith.constant dense<0.000000e+00> : vector<64x128xf32>
    %2 = tpu.matmul %0, %1, %cst {dimension_numbers = #tpu.dot_dimension_numbers<[1], [0], [0], [1], [0, 0, 1, 1], [], []>} : vector<64x128xf32>, vector<128x128xf32>, vector<64x128xf32> -> vector<64x128xf32>
    %c0_3 = arith.constant 0 : index
    %c0_4 = arith.constant 0 : index
    %3 = vector.load %arg3[%c0_3, %c0_4] : memref<1x896xf32, #tpu.memory_space<vmem>>, vector<1x128xf32>
    %4 = vector.broadcast %3 : vector<1x128xf32> to vector<64x128xf32>
    %5 = arith.addf %2, %4 : vector<64x128xf32>
    %cst_5 = arith.constant 0.000000e+00 : f32
    %6 = vector.broadcast %cst_5 : f32 to vector<64x128xf32>
    %7 = arith.maximumf %5, %6 : vector<64x128xf32>
    %c128 = arith.constant 128 : index
    %c0_6 = arith.constant 0 : index
    %8 = vector.load %arg2[%c128, %c0_6] : memref<896x128xf32, #tpu.memory_space<vmem>>, vector<128x128xf32>
    %cst_7 = arith.constant dense<0.000000e+00> : vector<64x128xf32>
    %9 = tpu.matmul %7, %8, %cst_7 {dimension_numbers = #tpu.dot_dimension_numbers<[1], [0], [0], [1], [0, 0, 1, 1], [], []>} : vector<64x128xf32>, vector<128x128xf32>, vector<64x128xf32> -> vector<64x128xf32>
    %c0_8 = arith.constant 0 : index
    %c128_9 = arith.constant 128 : index
    %10 = vector.load %arg3[%c0_8, %c128_9] : memref<1x896xf32, #tpu.memory_space<vmem>>, vector<1x128xf32>
    %11 = vector.broadcast %10 : vector<1x128xf32> to vector<64x128xf32>
    %12 = arith.addf %9, %11 : vector<64x128xf32>
    %cst_10 = arith.constant 0.000000e+00 : f32
    %13 = vector.broadcast %cst_10 : f32 to vector<64x128xf32>
    %14 = arith.maximumf %12, %13 : vector<64x128xf32>
    %c256 = arith.constant 256 : index
    %c0_11 = arith.constant 0 : index
    %15 = vector.load %arg2[%c256, %c0_11] : memref<896x128xf32, #tpu.memory_space<vmem>>, vector<128x128xf32>
    %cst_12 = arith.constant dense<0.000000e+00> : vector<64x128xf32>
    %16 = tpu.matmul %14, %15, %cst_12 {dimension_numbers = #tpu.dot_dimension_numbers<[1], [0], [0], [1], [0, 0, 1, 1], [], []>} : vector<64x128xf32>, vector<128x128xf32>, vector<64x128xf32> -> vector<64x128xf32>
    %c0_13 = arith.constant 0 : index
    %c256_14 = arith.constant 256 : index
    %17 = vector.load %arg3[%c0_13, %c256_14] : memref<1x896xf32, #tpu.memory_space<vmem>>, vector<1x128xf32>
    %18 = vector.broadcast %17 : vector<1x128xf32> to vector<64x128xf32>
    %19 = arith.addf %16, %18 : vector<64x128xf32>
    %c384 = arith.constant 384 : index
    %c0_15 = arith.constant 0 : index
    %20 = vector.load %arg2[%c384, %c0_15] : memref<896x128xf32, #tpu.memory_space<vmem>>, vector<128x128xf32>
    %cst_16 = arith.constant dense<0.000000e+00> : vector<64x128xf32>
    %21 = tpu.matmul %19, %20, %cst_16 {dimension_numbers = #tpu.dot_dimension_numbers<[1], [0], [0], [1], [0, 0, 1, 1], [], []>} : vector<64x128xf32>, vector<128x128xf32>, vector<64x128xf32> -> vector<64x128xf32>
    %c0_17 = arith.constant 0 : index
    %c384_18 = arith.constant 384 : index
    %22 = vector.load %arg3[%c0_17, %c384_18] : memref<1x896xf32, #tpu.memory_space<vmem>>, vector<1x128xf32>
    %23 = vector.broadcast %22 : vector<1x128xf32> to vector<64x128xf32>
    %24 = arith.addf %21, %23 : vector<64x128xf32>
    %cst_19 = arith.constant 0.000000e+00 : f32
    %25 = vector.broadcast %cst_19 : f32 to vector<64x128xf32>
    %26 = arith.maximumf %24, %25 : vector<64x128xf32>
    %c0_20 = arith.constant 0 : index
    %c0_21 = arith.constant 0 : index
    %27 = vector.load %arg5[%c0_20, %c0_21] : memref<64x128xf32, #tpu.memory_space<vmem>>, vector<64x128xf32>
    tpu.vector_store %arg5[%c0_20, %c0_21], %26 {strides = array<i32>} : memref<64x128xf32, #tpu.memory_space<vmem>>, vector<64x128xf32>,
    %c512 = arith.constant 512 : index
    %c0_22 = arith.constant 0 : index
    %28 = vector.load %arg2[%c512, %c0_22] : memref<896x128xf32, #tpu.memory_space<vmem>>, vector<128x128xf32>
    %cst_23 = arith.constant dense<0.000000e+00> : vector<64x128xf32>
    %29 = tpu.matmul %26, %28, %cst_23 {dimension_numbers = #tpu.dot_dimension_numbers<[1], [0], [0], [1], [0, 0, 1, 1], [], []>} : vector<64x128xf32>, vector<128x128xf32>, vector<64x128xf32> -> vector<64x128xf32>
    %c0_24 = arith.constant 0 : index
    %c512_25 = arith.constant 512 : index
    %30 = vector.load %arg3[%c0_24, %c512_25] : memref<1x896xf32, #tpu.memory_space<vmem>>, vector<1x128xf32>
    %31 = vector.broadcast %30 : vector<1x128xf32> to vector<64x128xf32>
    %32 = arith.addf %29, %31 : vector<64x128xf32>
    %cst_26 = arith.constant 0.000000e+00 : f32
    %33 = vector.broadcast %cst_26 : f32 to vector<64x128xf32>
    %34 = arith.maximumf %32, %33 : vector<64x128xf32>
    %c640 = arith.constant 640 : index
    %c0_27 = arith.constant 0 : index
    %35 = vector.load %arg2[%c640, %c0_27] : memref<896x128xf32, #tpu.memory_space<vmem>>, vector<128x128xf32>
    %cst_28 = arith.constant dense<0.000000e+00> : vector<64x128xf32>
    %36 = tpu.matmul %34, %35, %cst_28 {dimension_numbers = #tpu.dot_dimension_numbers<[1], [0], [0], [1], [0, 0, 1, 1], [], []>} : vector<64x128xf32>, vector<128x128xf32>, vector<64x128xf32> -> vector<64x128xf32>
    %c0_29 = arith.constant 0 : index
    %c640_30 = arith.constant 640 : index
    %37 = vector.load %arg3[%c0_29, %c640_30] : memref<1x896xf32, #tpu.memory_space<vmem>>, vector<1x128xf32>
    %38 = vector.broadcast %37 : vector<1x128xf32> to vector<64x128xf32>
    %39 = arith.addf %36, %38 : vector<64x128xf32>
    %cst_31 = arith.constant 0.000000e+00 : f32
    %40 = vector.broadcast %cst_31 : f32 to vector<64x128xf32>
    %41 = arith.maximumf %39, %40 : vector<64x128xf32>
    %c768 = arith.constant 768 : index
    %c0_32 = arith.constant 0 : index
    %42 = vector.load %arg2[%c768, %c0_32] : memref<896x128xf32, #tpu.memory_space<vmem>>, vector<128x128xf32>
    %cst_33 = arith.constant dense<0.000000e+00> : vector<64x128xf32>
    %43 = tpu.matmul %41, %42, %cst_33 {dimension_numbers = #tpu.dot_dimension_numbers<[1], [0], [0], [1], [0, 0, 1, 1], [], []>} : vector<64x128xf32>, vector<128x128xf32>, vector<64x128xf32> -> vector<64x128xf32>
    %c0_34 = arith.constant 0 : index
    %c768_35 = arith.constant 768 : index
    %44 = vector.load %arg3[%c0_34, %c768_35] : memref<1x896xf32, #tpu.memory_space<vmem>>, vector<1x128xf32>
    %45 = vector.broadcast %44 : vector<1x128xf32> to vector<64x128xf32>
    %46 = arith.addf %43, %45 : vector<64x128xf32>
    %c0_36 = arith.constant 0 : index
    %c0_37 = arith.constant 0 : index
    %47 = vector.load %arg4[%c0_36, %c0_37] : memref<64x128xf32, #tpu.memory_space<vmem>>, vector<64x128xf32>
    tpu.vector_store %arg4[%c0_36, %c0_37], %46 {strides = array<i32>} : memref<64x128xf32, #tpu.memory_space<vmem>>, vector<64x128xf32>,
    return
  }
  func.func @transform_0(%arg0: i32) -> (i32, i32) {
    %c0_i32 = arith.constant 0 : i32
    %c0_i32_0 = arith.constant 0 : i32
    return %arg0, %c0_i32 : i32, i32
  }
  func.func @transform_1(%arg0: i32) -> (i32, i32) {
    %c0_i32 = arith.constant 0 : i32
    %c0_i32_0 = arith.constant 0 : i32
    %c0_i32_1 = arith.constant 0 : i32
    return %c0_i32, %c0_i32_0 : i32, i32
  }
  func.func @transform_2(%arg0: i32) -> (i32, i32) {
    %c0_i32 = arith.constant 0 : i32
    %c0_i32_0 = arith.constant 0 : i32
    %c0_i32_1 = arith.constant 0 : i32
    return %c0_i32, %c0_i32_0 : i32, i32
  }
  func.func @transform_3(%arg0: i32) -> (i32, i32) {
    %c0_i32 = arith.constant 0 : i32
    %c0_i32_0 = arith.constant 0 : i32
    return %arg0, %c0_i32 : i32, i32
  }
  func.func @transform_4(%arg0: i32) -> (i32, i32) {
    %c0_i32 = arith.constant 0 : i32
    %c0_i32_0 = arith.constant 0 : i32
    return %arg0, %c0_i32 : i32, i32
  }
}

</mosaic_0001>

<llo_original>
// kernel: tpu_custom_call.1
$region0: #{tpu_custom_call.1}
  #allocation0 [shape = 'u32[]', space=smem, size = 0x4, offset = 0x4, fixed_abs, tag = 'smem constant byte address 0x4 - core index']
  #allocation1 [shape = 'u32[144,128]{1,0:T(1,128)}', space=vmem, size = 0x12000, scoped, tag = 'internal scratch']
  %s0 = inlined_call_operand.hbm [shape: f32[64,128], index: 0, kind: input, shape index: {}]
  %s1 = inlined_call_operand.hbm [shape: f32[896,128], index: 1, kind: input, shape index: {}]
  %s2 = inlined_call_operand.vmem [shape: f32[1,896], index: 2, kind: input, shape index: {}]
  %s3 = inlined_call_operand.hbm [shape: f32[64,128], index: 3, kind: output, shape index: {0}]
  %s4 = inlined_call_operand.hbm [shape: f32[64,128], index: 4, kind: output, shape index: {1}]
  %5 = xla_tuple %s3, %s4
  %s6 = sld [smem:[#allocation0]]
  $region38: #{tpu_custom_call.1} parent=0
    _
  %s8 = ssub.s32 1, %s6
  %s9 = scalar_select 0, %s8, %s6
  $region1: #{tpu_custom_call.1} parent=0
    #allocation2 [shape = 'u8[32768]{0}', space=vmem, size = 0x8000, scoped, tag = 'input window, operand 0, single buffered']
    #allocation3 [shape = 's32[1]{0}', space=sflag, size = 0x4, scoped, tag = 'scoped memory for tpu_custom_call.1']
    #allocation4 [shape = 's32[1]{0}', space=sflag, size = 0x4, scoped, tag = 'scoped memory for tpu_custom_call.1']
    #allocation5 [shape = 'u8[458752]{0}', space=vmem, size = 0x70000, scoped, tag = 'input window, operand 1, single buffered']
    #allocation6 [shape = 's32[1]{0}', space=sflag, size = 0x4, scoped, tag = 'scoped memory for tpu_custom_call.1']
    #allocation7 [shape = 'u8[32768]{0}', space=vmem, size = 0x8000, scoped, tag = 'output window, operand 0, single buffered']
    #allocation8 [shape = 'u8[32768]{0}', space=vmem, size = 0x8000, scoped, tag = 'output window, operand 1, single buffered']
    #allocation9 [shape = 's32[1]{0}', space=sflag, size = 0x4, scoped, tag = 'scoped memory for tpu_custom_call.1']
    %10 = vsyncpa [#allocation3], 0
    %11 = vsyncpa [#allocation6], 0
    %12 = vsyncpa [#allocation4], 0
    %13 = vsyncpa [#allocation9], 0
    // Predicated region
    $region2: #{tpu_custom_call.1} parent=1 // pred_check
      _
    $region3: #{tpu_custom_call.1} parent=1 // pred_check_branch
      %15 = sbr.rel (0) target = $region5
    $region4: #{tpu_custom_call.1} parent=1 // pred_region
      %s17 = ssub.s32 1024, 1024
      %18 = vsyncadd [#allocation3], %s17
      %s19 = sshll.u32 [#allocation2], 4
      %s20 = int_to_ptr.vmem [resolvable:$true] %s19
      %25 = dma.hbm_to_vmem [thread:$0]  %s0, 1024, %s20, [#allocation3], 128, 128, 8
    $region5: #{tpu_custom_call.1} parent=1 // pred_fallthru
      _
    // Predicated region
    $region6: #{tpu_custom_call.1} parent=1 // pred_check
      _
    $region7: #{tpu_custom_call.1} parent=1 // pred_check_branch
      %27 = sbr.rel (0) target = $region9
    $region8: #{tpu_custom_call.1} parent=1 // pred_region
      %s29 = ssub.s32 14336, 14336
      %30 = vsyncadd [#allocation6], %s29
      %s31 = sshll.u32 [#allocation5], 4
      %s32 = int_to_ptr.vmem [resolvable:$true] %s31
      %37 = dma.hbm_to_vmem [thread:$0]  %s1, 14336, %s32, [#allocation6], 128, 128, 8
    $region9: #{tpu_custom_call.1} parent=1 // pred_fallthru
      _
    // Predicated region
    $region10: #{tpu_custom_call.1} parent=1 // pred_check
      _
    $region11: #{tpu_custom_call.1} parent=1 // pred_check_branch
      %39 = sbr.rel (0) target = $region13
    $region12: #{tpu_custom_call.1} parent=1 // pred_region
      _
    $region13: #{tpu_custom_call.1} parent=1 // pred_fallthru
      _
    // Predicated region
    $region14: #{tpu_custom_call.1} parent=1 // pred_check
      _
    $region15: #{tpu_custom_call.1} parent=1 // pred_check_branch
      %41 = sbr.rel (0) target = $region17
    $region16: #{tpu_custom_call.1} parent=1 // pred_region
      %42 = dma.done [#allocation3], 1024
    $region17: #{tpu_custom_call.1} parent=1 // pred_fallthru
      _
    // Predicated region
    $region18: #{tpu_custom_call.1} parent=1 // pred_check
      _
    $region19: #{tpu_custom_call.1} parent=1 // pred_check_branch
      %44 = sbr.rel (0) target = $region21
    $region20: #{tpu_custom_call.1} parent=1 // pred_region
      %45 = dma.done [#allocation6], 14336
    $region21: #{tpu_custom_call.1} parent=1 // pred_fallthru
      _
    %v46 = vld [vmem:[#allocation2] sm:$0xff]
    %v47 = vld [vmem:[#allocation2 + $0x8] sm:$0xff]
    %v48 = vld [vmem:[#allocation2 + $0x10] sm:$0xff]
    %v49 = vld [vmem:[#allocation2 + $0x18] sm:$0xff]
    %v50 = vld [vmem:[#allocation2 + $0x20] sm:$0xff]
    %v51 = vld [vmem:[#allocation2 + $0x28] sm:$0xff]
    %v52 = vld [vmem:[#allocation2 + $0x30] sm:$0xff]
    %v53 = vld [vmem:[#allocation2 + $0x38] sm:$0xff]
    %v54 = vld [vmem:[#allocation5] sm:$0xff]
    %v55 = vld [vmem:[#allocation5 + $0x8] sm:$0xff]
    %v56 = vld [vmem:[#allocation5 + $0x10] sm:$0xff]
    %v57 = vld [vmem:[#allocation5 + $0x18] sm:$0xff]
    %v58 = vld [vmem:[#allocation5 + $0x20] sm:$0xff]
    %v59 = vld [vmem:[#allocation5 + $0x28] sm:$0xff]
    %v60 = vld [vmem:[#allocation5 + $0x30] sm:$0xff]
    %v61 = vld [vmem:[#allocation5 + $0x38] sm:$0xff]
    %v62 = vld [vmem:[#allocation5 + $0x40] sm:$0xff]
    %v63 = vld [vmem:[#allocation5 + $0x48] sm:$0xff]
    %v64 = vld [vmem:[#allocation5 + $0x50] sm:$0xff]
    %v65 = vld [vmem:[#allocation5 + $0x58] sm:$0xff]
    %v66 = vld [vmem:[#allocation5 + $0x60] sm:$0xff]
    %v67 = vld [vmem:[#allocation5 + $0x68] sm:$0xff]
    %v68 = vld [vmem:[#allocation5 + $0x70] sm:$0xff]
    %v69 = vld [vmem:[#allocation5 + $0x78] sm:$0xff]
    %v70 = vld [vmem:[%s2] sm:$0x1]
    %v72 = vlaneseq
    %v73 = vshrl.u32 %v72, 7
    %v74 = vsub.s32 0, %v73
    %v75 = vrot.slane %v70, %v74
    %77 = vmatprep.subr.mxu0 0.0
    %78 = vmatpush1.msra.mxu0 %v54
    %79 = vmatprep.subr.mxu0 0.0
    %80 = vmatpush1.msra.mxu0 %v55
    %81 = vmatprep.subr.mxu0 0.0
    %82 = vmatpush1.msra.mxu0 %v56
    %83 = vmatprep.subr.mxu0 0.0
    %84 = vmatpush1.msra.mxu0 %v57
    %85 = vmatprep.subr.mxu0 0.0
    %86 = vmatpush1.msra.mxu0 %v58
    %87 = vmatprep.subr.mxu0 0.0
    %88 = vmatpush1.msra.mxu0 %v59
    %89 = vmatprep.subr.mxu0 0.0
    %90 = vmatpush1.msra.mxu0 %v60
    %91 = vmatprep.subr.mxu0 0.0
    %92 = vmatpush1.msra.mxu0 %v61
    %93 = vmatprep.subr.mxu0 0.0
    %94 = vmatpush1.msra.mxu0 %v62
    %95 = vmatprep.subr.mxu0 0.0
    %96 = vmatpush1.msra.mxu0 %v63
    %97 = vmatprep.subr.mxu0 0.0
    %98 = vmatpush1.msra.mxu0 %v64
    %99 = vmatprep.subr.mxu0 0.0
    %100 = vmatpush1.msra.mxu0 %v65
    %101 = vmatprep.subr.mxu0 0.0
    %102 = vmatpush1.msra.mxu0 %v66
    %103 = vmatprep.subr.mxu0 0.0
    %104 = vmatpush1.msra.mxu0 %v67
    %105 = vmatprep.subr.mxu0 0.0
    %106 = vmatpush1.msra.mxu0 %v68
    %107 = vmatprep.subr.mxu0 0.0
    %108 = vmatpush1.msra.mxu0 %v69
    %109 = vmatprep.subr.mxu0 0.0
    %110 = vmatpush1.msra.mxu0 0.0
    %111 = vmatprep.subr.mxu0 0.0
    %112 = vmatpush1.msra.mxu0 0.0
    %113 = vmatprep.subr.mxu0 0.0
    %114 = vmatpush1.msra.mxu0 0.0
    %115 = vmatprep.subr.mxu0 0.0
    %116 = vmatpush1.msra.mxu0 0.0
    %117 = vmatprep.subr.mxu0 0.0
    %118 = vmatpush1.msra.mxu0 0.0
    %119 = vmatprep.subr.mxu0 0.0
    %120 = vmatpush1.msra.mxu0 0.0
    %121 = vmatprep.subr.mxu0 0.0
    %122 = vmatpush1.msra.mxu0 0.0
    %123 = vmatprep.subr.mxu0 0.0
    %124 = vmatpush1.msra.mxu0 0.0
    %125 = vmatprep.subr.mxu0 0.0
    %126 = vmatpush1.msra.mxu0 0.0
    %127 = vmatprep.subr.mxu0 0.0
    %128 = vmatpush1.msra.mxu0 0.0
    %129 = vmatprep.subr.mxu0 0.0
    %130 = vmatpush1.msra.mxu0 0.0
    %131 = vmatprep.subr.mxu0 0.0
    %132 = vmatpush1.msra.mxu0 0.0
    %133 = vmatprep.subr.mxu0 0.0
    %134 = vmatpush1.msra.mxu0 0.0
    %135 = vmatprep.subr.mxu0 0.0
    %136 = vmatpush1.msra.mxu0 0.0
    %137 = vmatprep.subr.mxu0 0.0
    %138 = vmatpush1.msra.mxu0 0.0
    %139 = vmatprep.subr.mxu0 0.0
    %140 = vmatpush1.msra.mxu0 0.0
    %141 = vmatprep.mubr.f32.mxu0 0.0
    %142 = vmatmul.mubr.f32.gmra.mrb[0].mxu0 %v46
    %v143 = vpop.f32.mrb[0].mxu0
    %v144 = vadd.f32 %v75, %v143
    %v145 = vpop.f32.mrb[0].mxu0
    %146 = vmatprep.mubr.f32.mxu0 0.0
    %147 = vmatmul.mubr.f32.gmra.mrb[0].mxu0 %v47
    %v148 = vpop.f32.mrb[0].mxu0
    %v149 = vadd.f32 %v75, %v148
    %v150 = vpop.f32.mrb[0].mxu0
    %151 = vmatprep.mubr.f32.mxu0 0.0
    %152 = vmatmul.mubr.f32.gmra.mrb[0].mxu0 %v48
    %v153 = vpop.f32.mrb[0].mxu0
    %v154 = vadd.f32 %v75, %v153
    %v155 = vpop.f32.mrb[0].mxu0
    %156 = vmatprep.mubr.f32.mxu0 0.0
    %157 = vmatmul.mubr.f32.gmra.mrb[0].mxu0 %v49
    %v158 = vpop.f32.mrb[0].mxu0
    %v159 = vadd.f32 %v75, %v158
    %v160 = vpop.f32.mrb[0].mxu0
    %161 = vmatprep.mubr.f32.mxu0 0.0
    %162 = vmatmul.mubr.f32.gmra.mrb[0].mxu0 %v50
    %v163 = vpop.f32.mrb[0].mxu0
    %v164 = vadd.f32 %v75, %v163
    %v165 = vpop.f32.mrb[0].mxu0
    %166 = vmatprep.mubr.f32.mxu0 0.0
    %167 = vmatmul.mubr.f32.gmra.mrb[0].mxu0 %v51
    %v168 = vpop.f32.mrb[0].mxu0
    %v169 = vadd.f32 %v75, %v168
    %v170 = vpop.f32.mrb[0].mxu0
    %171 = vmatprep.mubr.f32.mxu0 0.0
    %172 = vmatmul.mubr.f32.gmra.mrb[0].mxu0 %v52
    %v173 = vpop.f32.mrb[0].mxu0
    %v174 = vadd.f32 %v75, %v173
    %v175 = vpop.f32.mrb[0].mxu0
    %176 = vmatprep.mubr.f32.mxu0 0.0
    %177 = vmatmul.mubr.f32.gmra.mrb[0].mxu0 %v53
    %v178 = vpop.f32.mrb[0].mxu0
    %v179 = vadd.f32 %v75, %v178
    %v180 = vpop.f32.mrb[0].mxu0
    %181 = vdwg.mxu0
    %v182 = vmax.f32 %v144, 0.0
    %v183 = vmax.f32 %v149, 0.0
    %v184 = vmax.f32 %v154, 0.0
    %v185 = vmax.f32 %v159, 0.0
    %v186 = vmax.f32 %v164, 0.0
    %v187 = vmax.f32 %v169, 0.0
    %v188 = vmax.f32 %v174, 0.0
    %v189 = vmax.f32 %v179, 0.0
    %v190 = vld [vmem:[#allocation5 + $0x80] sm:$0xff]
    %v191 = vld [vmem:[#allocation5 + $0x88] sm:$0xff]
    %v192 = vld [vmem:[#allocation5 + $0x90] sm:$0xff]
    %v193 = vld [vmem:[#allocation5 + $0x98] sm:$0xff]
    %v194 = vld [vmem:[#allocation5 + $0xa0] sm:$0xff]
    %v195 = vld [vmem:[#allocation5 + $0xa8] sm:$0xff]
    %v196 = vld [vmem:[#allocation5 + $0xb0] sm:$0xff]
    %v197 = vld [vmem:[#allocation5 + $0xb8] sm:$0xff]
    %v198 = vld [vmem:[#allocation5 + $0xc0] sm:$0xff]
    %v199 = vld [vmem:[#allocation5 + $0xc8] sm:$0xff]
    %v200 = vld [vmem:[#allocation5 + $0xd0] sm:$0xff]
    %v201 = vld [vmem:[#allocation5 + $0xd8] sm:$0xff]
    %v202 = vld [vmem:[#allocation5 + $0xe0] sm:$0xff]
    %v203 = vld [vmem:[#allocation5 + $0xe8] sm:$0xff]
    %v204 = vld [vmem:[#allocation5 + $0xf0] sm:$0xff]
    %v205 = vld [vmem:[#allocation5 + $0xf8] sm:$0xff]
    %v206 = vld [vmem:[%s2 + $0x1] sm:$0x1]
    %v208 = vlaneseq
    %v209 = vshrl.u32 %v208, 7
    %v210 = vsub.s32 0, %v209
    %v211 = vrot.slane %v206, %v210
    %213 = vmatprep.subr.mxu0 0.0
    %214 = vmatpush1.msra.mxu0 %v190
    %215 = vmatprep.subr.mxu0 0.0
    %216 = vmatpush1.msra.mxu0 %v191
    %217 = vmatprep.subr.mxu0 0.0
    %218 = vmatpush1.msra.mxu0 %v192
    %219 = vmatprep.subr.mxu0 0.0
    %220 = vmatpush1.msra.mxu0 %v193
    %221 = vmatprep.subr.mxu0 0.0
    %222 = vmatpush1.msra.mxu0 %v194
    %223 = vmatprep.subr.mxu0 0.0
    %224 = vmatpush1.msra.mxu0 %v195
    %225 = vmatprep.subr.mxu0 0.0
    %226 = vmatpush1.msra.mxu0 %v196
    %227 = vmatprep.subr.mxu0 0.0
    %228 = vmatpush1.msra.mxu0 %v197
    %229 = vmatprep.subr.mxu0 0.0
    %230 = vmatpush1.msra.mxu0 %v198
    %231 = vmatprep.subr.mxu0 0.0
    %232 = vmatpush1.msra.mxu0 %v199
    %233 = vmatprep.subr.mxu0 0.0
    %234 = vmatpush1.msra.mxu0 %v200
    %235 = vmatprep.subr.mxu0 0.0
    %236 = vmatpush1.msra.mxu0 %v201
    %237 = vmatprep.subr.mxu0 0.0
    %238 = vmatpush1.msra.mxu0 %v202
    %239 = vmatprep.subr.mxu0 0.0
    %240 = vmatpush1.msra.mxu0 %v203
    %241 = vmatprep.subr.mxu0 0.0
    %242 = vmatpush1.msra.mxu0 %v204
    %243 = vmatprep.subr.mxu0 0.0
    %244 = vmatpush1.msra.mxu0 %v205
    %245 = vmatprep.subr.mxu0 0.0
    %246 = vmatpush1.msra.mxu0 0.0
    %247 = vmatprep.subr.mxu0 0.0
    %248 = vmatpush1.msra.mxu0 0.0
    %249 = vmatprep.subr.mxu0 0.0
    %250 = vmatpush1.msra.mxu0 0.0
    %251 = vmatprep.subr.mxu0 0.0
    %252 = vmatpush1.msra.mxu0 0.0
    %253 = vmatprep.subr.mxu0 0.0
    %254 = vmatpush1.msra.mxu0 0.0
    %255 = vmatprep.subr.mxu0 0.0
    %256 = vmatpush1.msra.mxu0 0.0
    %257 = vmatprep.subr.mxu0 0.0
    %258 = vmatpush1.msra.mxu0 0.0
    %259 = vmatprep.subr.mxu0 0.0
    %260 = vmatpush1.msra.mxu0 0.0
    %261 = vmatprep.subr.mxu0 0.0
    %262 = vmatpush1.msra.mxu0 0.0
    %263 = vmatprep.subr.mxu0 0.0
    %264 = vmatpush1.msra.mxu0 0.0
    %265 = vmatprep.subr.mxu0 0.0
    %266 = vmatpush1.msra.mxu0 0.0
    %267 = vmatprep.subr.mxu0 0.0
    %268 = vmatpush1.msra.mxu0 0.0
    %269 = vmatprep.subr.mxu0 0.0
    %270 = vmatpush1.msra.mxu0 0.0
    %271 = vmatprep.subr.mxu0 0.0
    %272 = vmatpush1.msra.mxu0 0.0
    %273 = vmatprep.subr.mxu0 0.0
    %274 = vmatpush1.msra.mxu0 0.0
    %275 = vmatprep.subr.mxu0 0.0
    %276 = vmatpush1.msra.mxu0 0.0
    %277 = vmatprep.mubr.f32.mxu0 0.0
    %278 = vmatmul.mubr.f32.gmra.mrb[0].mxu0 %v182
    %v279 = vpop.f32.mrb[0].mxu0
    %v280 = vadd.f32 %v211, %v279
    %v281 = vpop.f32.mrb[0].mxu0
    %282 = vmatprep.mubr.f32.mxu0 0.0
    %283 = vmatmul.mubr.f32.gmra.mrb[0].mxu0 %v183
    %v284 = vpop.f32.mrb[0].mxu0
    %v285 = vadd.f32 %v211, %v284
    %v286 = vpop.f32.mrb[0].mxu0
    %287 = vmatprep.mubr.f32.mxu0 0.0
    %288 = vmatmul.mubr.f32.gmra.mrb[0].mxu0 %v184
    %v289 = vpop.f32.mrb[0].mxu0
    %v290 = vadd.f32 %v211, %v289
    %v291 = vpop.f32.mrb[0].mxu0
    %292 = vmatprep.mubr.f32.mxu0 0.0
    %293 = vmatmul.mubr.f32.gmra.mrb[0].mxu0 %v185
    %v294 = vpop.f32.mrb[0].mxu0
    %v295 = vadd.f32 %v211, %v294
    %v296 = vpop.f32.mrb[0].mxu0
    %297 = vmatprep.mubr.f32.mxu0 0.0
    %298 = vmatmul.mubr.f32.gmra.mrb[0].mxu0 %v186
    %v299 = vpop.f32.mrb[0].mxu0
    %v300 = vadd.f32 %v211, %v299
    %v301 = vpop.f32.mrb[0].mxu0
    %302 = vmatprep.mubr.f32.mxu0 0.0
    %303 = vmatmul.mubr.f32.gmra.mrb[0].mxu0 %v187
    %v304 = vpop.f32.mrb[0].mxu0
    %v305 = vadd.f32 %v211, %v304
    %v306 = vpop.f32.mrb[0].mxu0
    %307 = vmatprep.mubr.f32.mxu0 0.0
    %308 = vmatmul.mubr.f32.gmra.mrb[0].mxu0 %v188
    %v309 = vpop.f32.mrb[0].mxu0
    %v310 = vadd.f32 %v211, %v309
    %v311 = vpop.f32.mrb[0].mxu0
    %312 = vmatprep.mubr.f32.mxu0 0.0
    %313 = vmatmul.mubr.f32.gmra.mrb[0].mxu0 %v189
    %v314 = vpop.f32.mrb[0].mxu0
    %v315 = vadd.f32 %v211, %v314
    %v316 = vpop.f32.mrb[0].mxu0
    %317 = vdwg.mxu0
    %v318 = vmax.f32 %v280, 0.0
    %v319 = vmax.f32 %v285, 0.0
    %v320 = vmax.f32 %v290, 0.0
    %v321 = vmax.f32 %v295, 0.0
    %v322 = vmax.f32 %v300, 0.0
    %v323 = vmax.f32 %v305, 0.0
    %v324 = vmax.f32 %v310, 0.0
    %v325 = vmax.f32 %v315, 0.0
    %v326 = vld [vmem:[#allocation5 + $0x100] sm:$0xff]
    %v327 = vld [vmem:[#allocation5 + $0x108] sm:$0xff]
    %v328 = vld [vmem:[#allocation5 + $0x110] sm:$0xff]
    %v329 = vld [vmem:[#allocation5 + $0x118] sm:$0xff]
    %v330 = vld [vmem:[#allocation5 + $0x120] sm:$0xff]
    %v331 = vld [vmem:[#allocation5 + $0x128] sm:$0xff]
    %v332 = vld [vmem:[#allocation5 + $0x130] sm:$0xff]
    %v333 = vld [vmem:[#allocation5 + $0x138] sm:$0xff]
    %v334 = vld [vmem:[#allocation5 + $0x140] sm:$0xff]
    %v335 = vld [vmem:[#allocation5 + $0x148] sm:$0xff]
    %v336 = vld [vmem:[#allocation5 + $0x150] sm:$0xff]
    %v337 = vld [vmem:[#allocation5 + $0x158] sm:$0xff]
    %v338 = vld [vmem:[#allocation5 + $0x160] sm:$0xff]
    %v339 = vld [vmem:[#allocation5 + $0x168] sm:$0xff]
    %v340 = vld [vmem:[#allocation5 + $0x170] sm:$0xff]
    %v341 = vld [vmem:[#allocation5 + $0x178] sm:$0xff]
    %v342 = vld [vmem:[%s2 + $0x2] sm:$0x1]
    %v344 = vlaneseq
    %v345 = vshrl.u32 %v344, 7
    %v346 = vsub.s32 0, %v345
    %v347 = vrot.slane %v342, %v346
    %349 = vmatprep.subr.mxu0 0.0
    %350 = vmatpush1.msra.mxu0 %v326
    %351 = vmatprep.subr.mxu0 0.0
    %352 = vmatpush1.msra.mxu0 %v327
    %353 = vmatprep.subr.mxu0 0.0
    %354 = vmatpush1.msra.mxu0 %v328
    %355 = vmatprep.subr.mxu0 0.0
    %356 = vmatpush1.msra.mxu0 %v329
    %357 = vmatprep.subr.mxu0 0.0
    %358 = vmatpush1.msra.mxu0 %v330
    %359 = vmatprep.subr.mxu0 0.0
    %360 = vmatpush1.msra.mxu0 %v331
    %361 = vmatprep.subr.mxu0 0.0
    %362 = vmatpush1.msra.mxu0 %v332
    %363 = vmatprep.subr.mxu0 0.0
    %364 = vmatpush1.msra.mxu0 %v333
    %365 = vmatprep.subr.mxu0 0.0
    %366 = vmatpush1.msra.mxu0 %v334
    %367 = vmatprep.subr.mxu0 0.0
    %368 = vmatpush1.msra.mxu0 %v335
    %369 = vmatprep.subr.mxu0 0.0
    %370 = vmatpush1.msra.mxu0 %v336
    %371 = vmatprep.subr.mxu0 0.0
    %372 = vmatpush1.msra.mxu0 %v337
    %373 = vmatprep.subr.mxu0 0.0
    %374 = vmatpush1.msra.mxu0 %v338
    %375 = vmatprep.subr.mxu0 0.0
    %376 = vmatpush1.msra.mxu0 %v339
    %377 = vmatprep.subr.mxu0 0.0
    %378 = vmatpush1.msra.mxu0 %v340
    %379 = vmatprep.subr.mxu0 0.0
    %380 = vmatpush1.msra.mxu0 %v341
    %381 = vmatprep.subr.mxu0 0.0
    %382 = vmatpush1.msra.mxu0 0.0
    %383 = vmatprep.subr.mxu0 0.0
    %384 = vmatpush1.msra.mxu0 0.0
    %385 = vmatprep.subr.mxu0 0.0
    %386 = vmatpush1.msra.mxu0 0.0
    %387 = vmatprep.subr.mxu0 0.0
    %388 = vmatpush1.msra.mxu0 0.0
    %389 = vmatprep.subr.mxu0 0.0
    %390 = vmatpush1.msra.mxu0 0.0
    %391 = vmatprep.subr.mxu0 0.0
    %392 = vmatpush1.msra.mxu0 0.0
    %393 = vmatprep.subr.mxu0 0.0
    %394 = vmatpush1.msra.mxu0 0.0
    %395 = vmatprep.subr.mxu0 0.0
    %396 = vmatpush1.msra.mxu0 0.0
    %397 = vmatprep.subr.mxu0 0.0
    %398 = vmatpush1.msra.mxu0 0.0
    %399 = vmatprep.subr.mxu0 0.0
    %400 = vmatpush1.msra.mxu0 0.0
    %401 = vmatprep.subr.mxu0 0.0
    %402 = vmatpush1.msra.mxu0 0.0
    %403 = vmatprep.subr.mxu0 0.0
    %404 = vmatpush1.msra.mxu0 0.0
    %405 = vmatprep.subr.mxu0 0.0
    %406 = vmatpush1.msra.mxu0 0.0
    %407 = vmatprep.subr.mxu0 0.0
    %408 = vmatpush1.msra.mxu0 0.0
    %409 = vmatprep.subr.mxu0 0.0
    %410 = vmatpush1.msra.mxu0 0.0
    %411 = vmatprep.subr.mxu0 0.0
    %412 = vmatpush1.msra.mxu0 0.0
    %413 = vmatprep.mubr.f32.mxu0 0.0
    %414 = vmatmul.mubr.f32.gmra.mrb[0].mxu0 %v318
    %v415 = vpop.f32.mrb[0].mxu0
    %v416 = vadd.f32 %v347, %v415
    %v417 = vpop.f32.mrb[0].mxu0
    %418 = vmatprep.mubr.f32.mxu0 0.0
    %419 = vmatmul.mubr.f32.gmra.mrb[0].mxu0 %v319
    %v420 = vpop.f32.mrb[0].mxu0
    %v421 = vadd.f32 %v347, %v420
    %v422 = vpop.f32.mrb[0].mxu0
    %423 = vmatprep.mubr.f32.mxu0 0.0
    %424 = vmatmul.mubr.f32.gmra.mrb[0].mxu0 %v320
    %v425 = vpop.f32.mrb[0].mxu0
    %v426 = vadd.f32 %v347, %v425
    %v427 = vpop.f32.mrb[0].mxu0
    %428 = vmatprep.mubr.f32.mxu0 0.0
    %429 = vmatmul.mubr.f32.gmra.mrb[0].mxu0 %v321
    %v430 = vpop.f32.mrb[0].mxu0
    %v431 = vadd.f32 %v347, %v430
    %v432 = vpop.f32.mrb[0].mxu0
    %433 = vmatprep.mubr.f32.mxu0 0.0
    %434 = vmatmul.mubr.f32.gmra.mrb[0].mxu0 %v322
    %v435 = vpop.f32.mrb[0].mxu0
    %v436 = vadd.f32 %v347, %v435
    %v437 = vpop.f32.mrb[0].mxu0
    %438 = vmatprep.mubr.f32.mxu0 0.0
    %439 = vmatmul.mubr.f32.gmra.mrb[0].mxu0 %v323
    %v440 = vpop.f32.mrb[0].mxu0
    %v441 = vadd.f32 %v347, %v440
    %v442 = vpop.f32.mrb[0].mxu0
    %443 = vmatprep.mubr.f32.mxu0 0.0
    %444 = vmatmul.mubr.f32.gmra.mrb[0].mxu0 %v324
    %v445 = vpop.f32.mrb[0].mxu0
    %v446 = vadd.f32 %v347, %v445
    %v447 = vpop.f32.mrb[0].mxu0
    %448 = vmatprep.mubr.f32.mxu0 0.0
    %449 = vmatmul.mubr.f32.gmra.mrb[0].mxu0 %v325
    %v450 = vpop.f32.mrb[0].mxu0
    %v451 = vadd.f32 %v347, %v450
    %v452 = vpop.f32.mrb[0].mxu0
    %453 = vdwg.mxu0
    %v454 = vld [vmem:[#allocation5 + $0x180] sm:$0xff]
    %v455 = vld [vmem:[#allocation5 + $0x188] sm:$0xff]
    %v456 = vld [vmem:[#allocation5 + $0x190] sm:$0xff]
    %v457 = vld [vmem:[#allocation5 + $0x198] sm:$0xff]
    %v458 = vld [vmem:[#allocation5 + $0x1a0] sm:$0xff]
    %v459 = vld [vmem:[#allocation5 + $0x1a8] sm:$0xff]
    %v460 = vld [vmem:[#allocation5 + $0x1b0] sm:$0xff]
    %v461 = vld [vmem:[#allocation5 + $0x1b8] sm:$0xff]
    %v462 = vld [vmem:[#allocation5 + $0x1c0] sm:$0xff]
    %v463 = vld [vmem:[#allocation5 + $0x1c8] sm:$0xff]
    %v464 = vld [vmem:[#allocation5 + $0x1d0] sm:$0xff]
    %v465 = vld [vmem:[#allocation5 + $0x1d8] sm:$0xff]
    %v466 = vld [vmem:[#allocation5 + $0x1e0] sm:$0xff]
    %v467 = vld [vmem:[#allocation5 + $0x1e8] sm:$0xff]
    %v468 = vld [vmem:[#allocation5 + $0x1f0] sm:$0xff]
    %v469 = vld [vmem:[#allocation5 + $0x1f8] sm:$0xff]
    %v470 = vld [vmem:[%s2 + $0x3] sm:$0x1]
    %v472 = vlaneseq
    %v473 = vshrl.u32 %v472, 7
    %v474 = vsub.s32 0, %v473
    %v475 = vrot.slane %v470, %v474
    %477 = vmatprep.subr.mxu0 0.0
    %478 = vmatpush1.msra.mxu0 %v454
    %479 = vmatprep.subr.mxu0 0.0
    %480 = vmatpush1.msra.mxu0 %v455
    %481 = vmatprep.subr.mxu0 0.0
    %482 = vmatpush1.msra.mxu0 %v456
    %483 = vmatprep.subr.mxu0 0.0
    %484 = vmatpush1.msra.mxu0 %v457
    %485 = vmatprep.subr.mxu0 0.0
    %486 = vmatpush1.msra.mxu0 %v458
    %487 = vmatprep.subr.mxu0 0.0
    %488 = vmatpush1.msra.mxu0 %v459
    %489 = vmatprep.subr.mxu0 0.0
    %490 = vmatpush1.msra.mxu0 %v460
    %491 = vmatprep.subr.mxu0 0.0
    %492 = vmatpush1.msra.mxu0 %v461
    %493 = vmatprep.subr.mxu0 0.0
    %494 = vmatpush1.msra.mxu0 %v462
    %495 = vmatprep.subr.mxu0 0.0
    %496 = vmatpush1.msra.mxu0 %v463
    %497 = vmatprep.subr.mxu0 0.0
    %498 = vmatpush1.msra.mxu0 %v464
    %499 = vmatprep.subr.mxu0 0.0
    %500 = vmatpush1.msra.mxu0 %v465
    %501 = vmatprep.subr.mxu0 0.0
    %502 = vmatpush1.msra.mxu0 %v466
    %503 = vmatprep.subr.mxu0 0.0
    %504 = vmatpush1.msra.mxu0 %v467
    %505 = vmatprep.subr.mxu0 0.0
    %506 = vmatpush1.msra.mxu0 %v468
    %507 = vmatprep.subr.mxu0 0.0
    %508 = vmatpush1.msra.mxu0 %v469
    %509 = vmatprep.subr.mxu0 0.0
    %510 = vmatpush1.msra.mxu0 0.0
    %511 = vmatprep.subr.mxu0 0.0
    %512 = vmatpush1.msra.mxu0 0.0
    %513 = vmatprep.subr.mxu0 0.0
    %514 = vmatpush1.msra.mxu0 0.0
    %515 = vmatprep.subr.mxu0 0.0
    %516 = vmatpush1.msra.mxu0 0.0
    %517 = vmatprep.subr.mxu0 0.0
    %518 = vmatpush1.msra.mxu0 0.0
    %519 = vmatprep.subr.mxu0 0.0
    %520 = vmatpush1.msra.mxu0 0.0
    %521 = vmatprep.subr.mxu0 0.0
    %522 = vmatpush1.msra.mxu0 0.0
    %523 = vmatprep.subr.mxu0 0.0
    %524 = vmatpush1.msra.mxu0 0.0
    %525 = vmatprep.subr.mxu0 0.0
    %526 = vmatpush1.msra.mxu0 0.0
    %527 = vmatprep.subr.mxu0 0.0
    %528 = vmatpush1.msra.mxu0 0.0
    %529 = vmatprep.subr.mxu0 0.0
    %530 = vmatpush1.msra.mxu0 0.0
    %531 = vmatprep.subr.mxu0 0.0
    %532 = vmatpush1.msra.mxu0 0.0
    %533 = vmatprep.subr.mxu0 0.0
    %534 = vmatpush1.msra.mxu0 0.0
    %535 = vmatprep.subr.mxu0 0.0
    %536 = vmatpush1.msra.mxu0 0.0
    %537 = vmatprep.subr.mxu0 0.0
    %538 = vmatpush1.msra.mxu0 0.0
    %539 = vmatprep.subr.mxu0 0.0
    %540 = vmatpush1.msra.mxu0 0.0
    %541 = vmatprep.mubr.f32.mxu0 0.0
    %542 = vmatmul.mubr.f32.gmra.mrb[0].mxu0 %v416
    %v543 = vpop.f32.mrb[0].mxu0
    %v544 = vadd.f32 %v475, %v543
    %v545 = vpop.f32.mrb[0].mxu0
    %546 = vmatprep.mubr.f32.mxu0 0.0
    %547 = vmatmul.mubr.f32.gmra.mrb[0].mxu0 %v421
    %v548 = vpop.f32.mrb[0].mxu0
    %v549 = vadd.f32 %v475, %v548
    %v550 = vpop.f32.mrb[0].mxu0
    %551 = vmatprep.mubr.f32.mxu0 0.0
    %552 = vmatmul.mubr.f32.gmra.mrb[0].mxu0 %v426
    %v553 = vpop.f32.mrb[0].mxu0
    %v554 = vadd.f32 %v475, %v553
    %v555 = vpop.f32.mrb[0].mxu0
    %556 = vmatprep.mubr.f32.mxu0 0.0
    %557 = vmatmul.mubr.f32.gmra.mrb[0].mxu0 %v431
    %v558 = vpop.f32.mrb[0].mxu0
    %v559 = vadd.f32 %v475, %v558
    %v560 = vpop.f32.mrb[0].mxu0
    %561 = vmatprep.mubr.f32.mxu0 0.0
    %562 = vmatmul.mubr.f32.gmra.mrb[0].mxu0 %v436
    %v563 = vpop.f32.mrb[0].mxu0
    %v564 = vadd.f32 %v475, %v563
    %v565 = vpop.f32.mrb[0].mxu0
    %566 = vmatprep.mubr.f32.mxu0 0.0
    %567 = vmatmul.mubr.f32.gmra.mrb[0].mxu0 %v441
    %v568 = vpop.f32.mrb[0].mxu0
    %v569 = vadd.f32 %v475, %v568
    %v570 = vpop.f32.mrb[0].mxu0
    %571 = vmatprep.mubr.f32.mxu0 0.0
    %572 = vmatmul.mubr.f32.gmra.mrb[0].mxu0 %v446
    %v573 = vpop.f32.mrb[0].mxu0
    %v574 = vadd.f32 %v475, %v573
    %v575 = vpop.f32.mrb[0].mxu0
    %576 = vmatprep.mubr.f32.mxu0 0.0
    %577 = vmatmul.mubr.f32.gmra.mrb[0].mxu0 %v451
    %v578 = vpop.f32.mrb[0].mxu0
    %v579 = vadd.f32 %v475, %v578
    %v580 = vpop.f32.mrb[0].mxu0
    %581 = vdwg.mxu0
    %v582 = vmax.f32 %v544, 0.0
    %v583 = vmax.f32 %v549, 0.0
    %v584 = vmax.f32 %v554, 0.0
    %v585 = vmax.f32 %v559, 0.0
    %v586 = vmax.f32 %v564, 0.0
    %v587 = vmax.f32 %v569, 0.0
    %v588 = vmax.f32 %v574, 0.0
    %v589 = vmax.f32 %v579, 0.0
    %590 = vst [vmem:[#allocation8] sm:$0xff] %v582
    %591 = vst [vmem:[#allocation8 + $0x8] sm:$0xff] %v583
    %592 = vst [vmem:[#allocation8 + $0x10] sm:$0xff] %v584
    %593 = vst [vmem:[#allocation8 + $0x18] sm:$0xff] %v585
    %594 = vst [vmem:[#allocation8 + $0x20] sm:$0xff] %v586
    %595 = vst [vmem:[#allocation8 + $0x28] sm:$0xff] %v587
    %596 = vst [vmem:[#allocation8 + $0x30] sm:$0xff] %v588
    %597 = vst [vmem:[#allocation8 + $0x38] sm:$0xff] %v589
    %v598 = vld [vmem:[#allocation5 + $0x200] sm:$0xff]
    %v599 = vld [vmem:[#allocation5 + $0x208] sm:$0xff]
    %v600 = vld [vmem:[#allocation5 + $0x210] sm:$0xff]
    %v601 = vld [vmem:[#allocation5 + $0x218] sm:$0xff]
    %v602 = vld [vmem:[#allocation5 + $0x220] sm:$0xff]
    %v603 = vld [vmem:[#allocation5 + $0x228] sm:$0xff]
    %v604 = vld [vmem:[#allocation5 + $0x230] sm:$0xff]
    %v605 = vld [vmem:[#allocation5 + $0x238] sm:$0xff]
    %v606 = vld [vmem:[#allocation5 + $0x240] sm:$0xff]
    %v607 = vld [vmem:[#allocation5 + $0x248] sm:$0xff]
    %v608 = vld [vmem:[#allocation5 + $0x250] sm:$0xff]
    %v609 = vld [vmem:[#allocation5 + $0x258] sm:$0xff]
    %v610 = vld [vmem:[#allocation5 + $0x260] sm:$0xff]
    %v611 = vld [vmem:[#allocation5 + $0x268] sm:$0xff]
    %v612 = vld [vmem:[#allocation5 + $0x270] sm:$0xff]
    %v613 = vld [vmem:[#allocation5 + $0x278] sm:$0xff]
    %v614 = vld [vmem:[%s2 + $0x4] sm:$0x1]
    %v616 = vlaneseq
    %v617 = vshrl.u32 %v616, 7
    %v618 = vsub.s32 0, %v617
    %v619 = vrot.slane %v614, %v618
    %621 = vmatprep.subr.mxu0 0.0
    %622 = vmatpush1.msra.mxu0 %v598
    %623 = vmatprep.subr.mxu0 0.0
    %624 = vmatpush1.msra.mxu0 %v599
    %625 = vmatprep.subr.mxu0 0.0
    %626 = vmatpush1.msra.mxu0 %v600
    %627 = vmatprep.subr.mxu0 0.0
    %628 = vmatpush1.msra.mxu0 %v601
    %629 = vmatprep.subr.mxu0 0.0
    %630 = vmatpush1.msra.mxu0 %v602
    %631 = vmatprep.subr.mxu0 0.0
    %632 = vmatpush1.msra.mxu0 %v603
    %633 = vmatprep.subr.mxu0 0.0
    %634 = vmatpush1.msra.mxu0 %v604
    %635 = vmatprep.subr.mxu0 0.0
    %636 = vmatpush1.msra.mxu0 %v605
    %637 = vmatprep.subr.mxu0 0.0
    %638 = vmatpush1.msra.mxu0 %v606
    %639 = vmatprep.subr.mxu0 0.0
    %640 = vmatpush1.msra.mxu0 %v607
    %641 = vmatprep.subr.mxu0 0.0
    %642 = vmatpush1.msra.mxu0 %v608
    %643 = vmatprep.subr.mxu0 0.0
    %644 = vmatpush1.msra.mxu0 %v609
    %645 = vmatprep.subr.mxu0 0.0
    %646 = vmatpush1.msra.mxu0 %v610
    %647 = vmatprep.subr.mxu0 0.0
    %648 = vmatpush1.msra.mxu0 %v611
    %649 = vmatprep.subr.mxu0 0.0
    %650 = vmatpush1.msra.mxu0 %v612
    %651 = vmatprep.subr.mxu0 0.0
    %652 = vmatpush1.msra.mxu0 %v613
    %653 = vmatprep.subr.mxu0 0.0
    %654 = vmatpush1.msra.mxu0 0.0
    %655 = vmatprep.subr.mxu0 0.0
    %656 = vmatpush1.msra.mxu0 0.0
    %657 = vmatprep.subr.mxu0 0.0
    %658 = vmatpush1.msra.mxu0 0.0
    %659 = vmatprep.subr.mxu0 0.0
    %660 = vmatpush1.msra.mxu0 0.0
    %661 = vmatprep.subr.mxu0 0.0
    %662 = vmatpush1.msra.mxu0 0.0
    %663 = vmatprep.subr.mxu0 0.0
    %664 = vmatpush1.msra.mxu0 0.0
    %665 = vmatprep.subr.mxu0 0.0
    %666 = vmatpush1.msra.mxu0 0.0
    %667 = vmatprep.subr.mxu0 0.0
    %668 = vmatpush1.msra.mxu0 0.0
    %669 = vmatprep.subr.mxu0 0.0
    %670 = vmatpush1.msra.mxu0 0.0
    %671 = vmatprep.subr.mxu0 0.0
    %672 = vmatpush1.msra.mxu0 0.0
    %673 = vmatprep.subr.mxu0 0.0
    %674 = vmatpush1.msra.mxu0 0.0
    %675 = vmatprep.subr.mxu0 0.0
    %676 = vmatpush1.msra.mxu0 0.0
    %677 = vmatprep.subr.mxu0 0.0
    %678 = vmatpush1.msra.mxu0 0.0
    %679 = vmatprep.subr.mxu0 0.0
    %680 = vmatpush1.msra.mxu0 0.0
    %681 = vmatprep.subr.mxu0 0.0
    %682 = vmatpush1.msra.mxu0 0.0
    %683 = vmatprep.subr.mxu0 0.0
    %684 = vmatpush1.msra.mxu0 0.0
    %685 = vmatprep.mubr.f32.mxu0 0.0
    %686 = vmatmul.mubr.f32.gmra.mrb[0].mxu0 %v582
    %v687 = vpop.f32.mrb[0].mxu0
    %v688 = vadd.f32 %v619, %v687
    %v689 = vpop.f32.mrb[0].mxu0
    %690 = vmatprep.mubr.f32.mxu0 0.0
    %691 = vmatmul.mubr.f32.gmra.mrb[0].mxu0 %v583
    %v692 = vpop.f32.mrb[0].mxu0
    %v693 = vadd.f32 %v619, %v692
    %v694 = vpop.f32.mrb[0].mxu0
    %695 = vmatprep.mubr.f32.mxu0 0.0
    %696 = vmatmul.mubr.f32.gmra.mrb[0].mxu0 %v584
    %v697 = vpop.f32.mrb[0].mxu0
    %v698 = vadd.f32 %v619, %v697
    %v699 = vpop.f32.mrb[0].mxu0
    %700 = vmatprep.mubr.f32.mxu0 0.0
    %701 = vmatmul.mubr.f32.gmra.mrb[0].mxu0 %v585
    %v702 = vpop.f32.mrb[0].mxu0
    %v703 = vadd.f32 %v619, %v702
    %v704 = vpop.f32.mrb[0].mxu0
    %705 = vmatprep.mubr.f32.mxu0 0.0
    %706 = vmatmul.mubr.f32.gmra.mrb[0].mxu0 %v586
    %v707 = vpop.f32.mrb[0].mxu0
    %v708 = vadd.f32 %v619, %v707
    %v709 = vpop.f32.mrb[0].mxu0
    %710 = vmatprep.mubr.f32.mxu0 0.0
    %711 = vmatmul.mubr.f32.gmra.mrb[0].mxu0 %v587
    %v712 = vpop.f32.mrb[0].mxu0
    %v713 = vadd.f32 %v619, %v712
    %v714 = vpop.f32.mrb[0].mxu0
    %715 = vmatprep.mubr.f32.mxu0 0.0
    %716 = vmatmul.mubr.f32.gmra.mrb[0].mxu0 %v588
    %v717 = vpop.f32.mrb[0].mxu0
    %v718 = vadd.f32 %v619, %v717
    %v719 = vpop.f32.mrb[0].mxu0
    %720 = vmatprep.mubr.f32.mxu0 0.0
    %721 = vmatmul.mubr.f32.gmra.mrb[0].mxu0 %v589
    %v722 = vpop.f32.mrb[0].mxu0
    %v723 = vadd.f32 %v619, %v722
    %v724 = vpop.f32.mrb[0].mxu0
    %725 = vdwg.mxu0
    %v726 = vmax.f32 %v688, 0.0
    %v727 = vmax.f32 %v693, 0.0
    %v728 = vmax.f32 %v698, 0.0
    %v729 = vmax.f32 %v703, 0.0
    %v730 = vmax.f32 %v708, 0.0
    %v731 = vmax.f32 %v713, 0.0
    %v732 = vmax.f32 %v718, 0.0
    %v733 = vmax.f32 %v723, 0.0
    %v734 = vld [vmem:[#allocation5 + $0x280] sm:$0xff]
    %v735 = vld [vmem:[#allocation5 + $0x288] sm:$0xff]
    %v736 = vld [vmem:[#allocation5 + $0x290] sm:$0xff]
    %v737 = vld [vmem:[#allocation5 + $0x298] sm:$0xff]
    %v738 = vld [vmem:[#allocation5 + $0x2a0] sm:$0xff]
    %v739 = vld [vmem:[#allocation5 + $0x2a8] sm:$0xff]
    %v740 = vld [vmem:[#allocation5 + $0x2b0] sm:$0xff]
    %v741 = vld [vmem:[#allocation5 + $0x2b8] sm:$0xff]
    %v742 = vld [vmem:[#allocation5 + $0x2c0] sm:$0xff]
    %v743 = vld [vmem:[#allocation5 + $0x2c8] sm:$0xff]
    %v744 = vld [vmem:[#allocation5 + $0x2d0] sm:$0xff]
    %v745 = vld [vmem:[#allocation5 + $0x2d8] sm:$0xff]
    %v746 = vld [vmem:[#allocation5 + $0x2e0] sm:$0xff]
    %v747 = vld [vmem:[#allocation5 + $0x2e8] sm:$0xff]
    %v748 = vld [vmem:[#allocation5 + $0x2f0] sm:$0xff]
    %v749 = vld [vmem:[#allocation5 + $0x2f8] sm:$0xff]
    %v750 = vld [vmem:[%s2 + $0x5] sm:$0x1]
    %v752 = vlaneseq
    %v753 = vshrl.u32 %v752, 7
    %v754 = vsub.s32 0, %v753
    %v755 = vrot.slane %v750, %v754
    %757 = vmatprep.subr.mxu0 0.0
    %758 = vmatpush1.msra.mxu0 %v734
    %759 = vmatprep.subr.mxu0 0.0
    %760 = vmatpush1.msra.mxu0 %v735
    %761 = vmatprep.subr.mxu0 0.0
    %762 = vmatpush1.msra.mxu0 %v736
    %763 = vmatprep.subr.mxu0 0.0
    %764 = vmatpush1.msra.mxu0 %v737
    %765 = vmatprep.subr.mxu0 0.0
    %766 = vmatpush1.msra.mxu0 %v738
    %767 = vmatprep.subr.mxu0 0.0
    %768 = vmatpush1.msra.mxu0 %v739
    %769 = vmatprep.subr.mxu0 0.0
    %770 = vmatpush1.msra.mxu0 %v740
    %771 = vmatprep.subr.mxu0 0.0
    %772 = vmatpush1.msra.mxu0 %v741
    %773 = vmatprep.subr.mxu0 0.0
    %774 = vmatpush1.msra.mxu0 %v742
    %775 = vmatprep.subr.mxu0 0.0
    %776 = vmatpush1.msra.mxu0 %v743
    %777 = vmatprep.subr.mxu0 0.0
    %778 = vmatpush1.msra.mxu0 %v744
    %779 = vmatprep.subr.mxu0 0.0
    %780 = vmatpush1.msra.mxu0 %v745
    %781 = vmatprep.subr.mxu0 0.0
    %782 = vmatpush1.msra.mxu0 %v746
    %783 = vmatprep.subr.mxu0 0.0
    %784 = vmatpush1.msra.mxu0 %v747
    %785 = vmatprep.subr.mxu0 0.0
    %786 = vmatpush1.msra.mxu0 %v748
    %787 = vmatprep.subr.mxu0 0.0
    %788 = vmatpush1.msra.mxu0 %v749
    %789 = vmatprep.subr.mxu0 0.0
    %790 = vmatpush1.msra.mxu0 0.0
    %791 = vmatprep.subr.mxu0 0.0
    %792 = vmatpush1.msra.mxu0 0.0
    %793 = vmatprep.subr.mxu0 0.0
    %794 = vmatpush1.msra.mxu0 0.0
    %795 = vmatprep.subr.mxu0 0.0
    %796 = vmatpush1.msra.mxu0 0.0
    %797 = vmatprep.subr.mxu0 0.0
    %798 = vmatpush1.msra.mxu0 0.0
    %799 = vmatprep.subr.mxu0 0.0
    %800 = vmatpush1.msra.mxu0 0.0
    %801 = vmatprep.subr.mxu0 0.0
    %802 = vmatpush1.msra.mxu0 0.0
    %803 = vmatprep.subr.mxu0 0.0
    %804 = vmatpush1.msra.mxu0 0.0
    %805 = vmatprep.subr.mxu0 0.0
    %806 = vmatpush1.msra.mxu0 0.0
    %807 = vmatprep.subr.mxu0 0.0
    %808 = vmatpush1.msra.mxu0 0.0
    %809 = vmatprep.subr.mxu0 0.0
    %810 = vmatpush1.msra.mxu0 0.0
    %811 = vmatprep.subr.mxu0 0.0
    %812 = vmatpush1.msra.mxu0 0.0
    %813 = vmatprep.subr.mxu0 0.0
    %814 = vmatpush1.msra.mxu0 0.0
    %815 = vmatprep.subr.mxu0 0.0
    %816 = vmatpush1.msra.mxu0 0.0
    %817 = vmatprep.subr.mxu0 0.0
    %818 = vmatpush1.msra.mxu0 0.0
    %819 = vmatprep.subr.mxu0 0.0
    %820 = vmatpush1.msra.mxu0 0.0
    %821 = vmatprep.mubr.f32.mxu0 0.0
    %822 = vmatmul.mubr.f32.gmra.mrb[0].mxu0 %v726
    %v823 = vpop.f32.mrb[0].mxu0
    %v824 = vadd.f32 %v755, %v823
    %v825 = vpop.f32.mrb[0].mxu0
    %826 = vmatprep.mubr.f32.mxu0 0.0
    %827 = vmatmul.mubr.f32.gmra.mrb[0].mxu0 %v727
    %v828 = vpop.f32.mrb[0].mxu0
    %v829 = vadd.f32 %v755, %v828
    %v830 = vpop.f32.mrb[0].mxu0
    %831 = vmatprep.mubr.f32.mxu0 0.0
    %832 = vmatmul.mubr.f32.gmra.mrb[0].mxu0 %v728
    %v833 = vpop.f32.mrb[0].mxu0
    %v834 = vadd.f32 %v755, %v833
    %v835 = vpop.f32.mrb[0].mxu0
    %836 = vmatprep.mubr.f32.mxu0 0.0
    %837 = vmatmul.mubr.f32.gmra.mrb[0].mxu0 %v729
    %v838 = vpop.f32.mrb[0].mxu0
    %v839 = vadd.f32 %v755, %v838
    %v840 = vpop.f32.mrb[0].mxu0
    %841 = vmatprep.mubr.f32.mxu0 0.0
    %842 = vmatmul.mubr.f32.gmra.mrb[0].mxu0 %v730
    %v843 = vpop.f32.mrb[0].mxu0
    %v844 = vadd.f32 %v755, %v843
    %v845 = vpop.f32.mrb[0].mxu0
    %846 = vmatprep.mubr.f32.mxu0 0.0
    %847 = vmatmul.mubr.f32.gmra.mrb[0].mxu0 %v731
    %v848 = vpop.f32.mrb[0].mxu0
    %v849 = vadd.f32 %v755, %v848
    %v850 = vpop.f32.mrb[0].mxu0
    %851 = vmatprep.mubr.f32.mxu0 0.0
    %852 = vmatmul.mubr.f32.gmra.mrb[0].mxu0 %v732
    %v853 = vpop.f32.mrb[0].mxu0
    %v854 = vadd.f32 %v755, %v853
    %v855 = vpop.f32.mrb[0].mxu0
    %856 = vmatprep.mubr.f32.mxu0 0.0
    %857 = vmatmul.mubr.f32.gmra.mrb[0].mxu0 %v733
    %v858 = vpop.f32.mrb[0].mxu0
    %v859 = vadd.f32 %v755, %v858
    %v860 = vpop.f32.mrb[0].mxu0
    %861 = vdwg.mxu0
    %v862 = vmax.f32 %v824, 0.0
    %v863 = vmax.f32 %v829, 0.0
    %v864 = vmax.f32 %v834, 0.0
    %v865 = vmax.f32 %v839, 0.0
    %v866 = vmax.f32 %v844, 0.0
    %v867 = vmax.f32 %v849, 0.0
    %v868 = vmax.f32 %v854, 0.0
    %v869 = vmax.f32 %v859, 0.0
    %v870 = vld [vmem:[#allocation5 + $0x300] sm:$0xff]
    %v871 = vld [vmem:[#allocation5 + $0x308] sm:$0xff]
    %v872 = vld [vmem:[#allocation5 + $0x310] sm:$0xff]
    %v873 = vld [vmem:[#allocation5 + $0x318] sm:$0xff]
    %v874 = vld [vmem:[#allocation5 + $0x320] sm:$0xff]
    %v875 = vld [vmem:[#allocation5 + $0x328] sm:$0xff]
    %v876 = vld [vmem:[#allocation5 + $0x330] sm:$0xff]
    %v877 = vld [vmem:[#allocation5 + $0x338] sm:$0xff]
    %v878 = vld [vmem:[#allocation5 + $0x340] sm:$0xff]
    %v879 = vld [vmem:[#allocation5 + $0x348] sm:$0xff]
    %v880 = vld [vmem:[#allocation5 + $0x350] sm:$0xff]
    %v881 = vld [vmem:[#allocation5 + $0x358] sm:$0xff]
    %v882 = vld [vmem:[#allocation5 + $0x360] sm:$0xff]
    %v883 = vld [vmem:[#allocation5 + $0x368] sm:$0xff]
    %v884 = vld [vmem:[#allocation5 + $0x370] sm:$0xff]
    %v885 = vld [vmem:[#allocation5 + $0x378] sm:$0xff]
    %v886 = vld [vmem:[%s2 + $0x6] sm:$0x1]
    %v888 = vlaneseq
    %v889 = vshrl.u32 %v888, 7
    %v890 = vsub.s32 0, %v889
    %v891 = vrot.slane %v886, %v890
    %893 = vmatprep.subr.mxu0 0.0
    %894 = vmatpush1.msra.mxu0 %v870
    %895 = vmatprep.subr.mxu0 0.0
    %896 = vmatpush1.msra.mxu0 %v871
    %897 = vmatprep.subr.mxu0 0.0
    %898 = vmatpush1.msra.mxu0 %v872
    %899 = vmatprep.subr.mxu0 0.0
    %900 = vmatpush1.msra.mxu0 %v873
    %901 = vmatprep.subr.mxu0 0.0
    %902 = vmatpush1.msra.mxu0 %v874
    %903 = vmatprep.subr.mxu0 0.0
    %904 = vmatpush1.msra.mxu0 %v875
    %905 = vmatprep.subr.mxu0 0.0
    %906 = vmatpush1.msra.mxu0 %v876
    %907 = vmatprep.subr.mxu0 0.0
    %908 = vmatpush1.msra.mxu0 %v877
    %909 = vmatprep.subr.mxu0 0.0
    %910 = vmatpush1.msra.mxu0 %v878
    %911 = vmatprep.subr.mxu0 0.0
    %912 = vmatpush1.msra.mxu0 %v879
    %913 = vmatprep.subr.mxu0 0.0
    %914 = vmatpush1.msra.mxu0 %v880
    %915 = vmatprep.subr.mxu0 0.0
    %916 = vmatpush1.msra.mxu0 %v881
    %917 = vmatprep.subr.mxu0 0.0
    %918 = vmatpush1.msra.mxu0 %v882
    %919 = vmatprep.subr.mxu0 0.0
    %920 = vmatpush1.msra.mxu0 %v883
    %921 = vmatprep.subr.mxu0 0.0
    %922 = vmatpush1.msra.mxu0 %v884
    %923 = vmatprep.subr.mxu0 0.0
    %924 = vmatpush1.msra.mxu0 %v885
    %925 = vmatprep.subr.mxu0 0.0
    %926 = vmatpush1.msra.mxu0 0.0
    %927 = vmatprep.subr.mxu0 0.0
    %928 = vmatpush1.msra.mxu0 0.0
    %929 = vmatprep.subr.mxu0 0.0
    %930 = vmatpush1.msra.mxu0 0.0
    %931 = vmatprep.subr.mxu0 0.0
    %932 = vmatpush1.msra.mxu0 0.0
    %933 = vmatprep.subr.mxu0 0.0
    %934 = vmatpush1.msra.mxu0 0.0
    %935 = vmatprep.subr.mxu0 0.0
    %936 = vmatpush1.msra.mxu0 0.0
    %937 = vmatprep.subr.mxu0 0.0
    %938 = vmatpush1.msra.mxu0 0.0
    %939 = vmatprep.subr.mxu0 0.0
    %940 = vmatpush1.msra.mxu0 0.0
    %941 = vmatprep.subr.mxu0 0.0
    %942 = vmatpush1.msra.mxu0 0.0
    %943 = vmatprep.subr.mxu0 0.0
    %944 = vmatpush1.msra.mxu0 0.0
    %945 = vmatprep.subr.mxu0 0.0
    %946 = vmatpush1.msra.mxu0 0.0
    %947 = vmatprep.subr.mxu0 0.0
    %948 = vmatpush1.msra.mxu0 0.0
    %949 = vmatprep.subr.mxu0 0.0
    %950 = vmatpush1.msra.mxu0 0.0
    %951 = vmatprep.subr.mxu0 0.0
    %952 = vmatpush1.msra.mxu0 0.0
    %953 = vmatprep.subr.mxu0 0.0
    %954 = vmatpush1.msra.mxu0 0.0
    %955 = vmatprep.subr.mxu0 0.0
    %956 = vmatpush1.msra.mxu0 0.0
    %957 = vmatprep.mubr.f32.mxu0 0.0
    %958 = vmatmul.mubr.f32.gmra.mrb[0].mxu0 %v862
    %v959 = vpop.f32.mrb[0].mxu0
    %v960 = vadd.f32 %v891, %v959
    %v961 = vpop.f32.mrb[0].mxu0
    %962 = vmatprep.mubr.f32.mxu0 0.0
    %963 = vmatmul.mubr.f32.gmra.mrb[0].mxu0 %v863
    %v964 = vpop.f32.mrb[0].mxu0
    %v965 = vadd.f32 %v891, %v964
    %v966 = vpop.f32.mrb[0].mxu0
    %967 = vmatprep.mubr.f32.mxu0 0.0
    %968 = vmatmul.mubr.f32.gmra.mrb[0].mxu0 %v864
    %v969 = vpop.f32.mrb[0].mxu0
    %v970 = vadd.f32 %v891, %v969
    %v971 = vpop.f32.mrb[0].mxu0
    %972 = vmatprep.mubr.f32.mxu0 0.0
    %973 = vmatmul.mubr.f32.gmra.mrb[0].mxu0 %v865
    %v974 = vpop.f32.mrb[0].mxu0
    %v975 = vadd.f32 %v891, %v974
    %v976 = vpop.f32.mrb[0].mxu0
    %977 = vmatprep.mubr.f32.mxu0 0.0
    %978 = vmatmul.mubr.f32.gmra.mrb[0].mxu0 %v866
    %v979 = vpop.f32.mrb[0].mxu0
    %v980 = vadd.f32 %v891, %v979
    %v981 = vpop.f32.mrb[0].mxu0
    %982 = vmatprep.mubr.f32.mxu0 0.0
    %983 = vmatmul.mubr.f32.gmra.mrb[0].mxu0 %v867
    %v984 = vpop.f32.mrb[0].mxu0
    %v985 = vadd.f32 %v891, %v984
    %v986 = vpop.f32.mrb[0].mxu0
    %987 = vmatprep.mubr.f32.mxu0 0.0
    %988 = vmatmul.mubr.f32.gmra.mrb[0].mxu0 %v868
    %v989 = vpop.f32.mrb[0].mxu0
    %v990 = vadd.f32 %v891, %v989
    %v991 = vpop.f32.mrb[0].mxu0
    %992 = vmatprep.mubr.f32.mxu0 0.0
    %993 = vmatmul.mubr.f32.gmra.mrb[0].mxu0 %v869
    %v994 = vpop.f32.mrb[0].mxu0
    %v995 = vadd.f32 %v891, %v994
    %v996 = vpop.f32.mrb[0].mxu0
    %997 = vdwg.mxu0
    %998 = vst [vmem:[#allocation7] sm:$0xff] %v960
    %999 = vst [vmem:[#allocation7 + $0x8] sm:$0xff] %v965
    %1000 = vst [vmem:[#allocation7 + $0x10] sm:$0xff] %v970
    %1001 = vst [vmem:[#allocation7 + $0x18] sm:$0xff] %v975
    %1002 = vst [vmem:[#allocation7 + $0x20] sm:$0xff] %v980
    %1003 = vst [vmem:[#allocation7 + $0x28] sm:$0xff] %v985
    %1004 = vst [vmem:[#allocation7 + $0x30] sm:$0xff] %v990
    %1005 = vst [vmem:[#allocation7 + $0x38] sm:$0xff] %v995
    // Predicated region
    $region22: #{tpu_custom_call.1} parent=1 // pred_check
      _
    $region23: #{tpu_custom_call.1} parent=1 // pred_check_branch
      %1007 = sbr.rel (0) target = $region25
    $region24: #{tpu_custom_call.1} parent=1 // pred_region
      %s1009 = ssub.s32 1024, 1024
      %1010 = vsyncadd [#allocation4], %s1009
      %s1011 = sshll.u32 [#allocation7], 4
      %s1012 = int_to_ptr.vmem [resolvable:$true] %s1011
      %1017 = dma.vmem_to_hbm [thread:$0]  %s1012, 1024, %s3, [#allocation4], 128, 128, 8
    $region25: #{tpu_custom_call.1} parent=1 // pred_fallthru
      _
    // Predicated region
    $region26: #{tpu_custom_call.1} parent=1 // pred_check
      _
    $region27: #{tpu_custom_call.1} parent=1 // pred_check_branch
      %1019 = sbr.rel (0) target = $region29
    $region28: #{tpu_custom_call.1} parent=1 // pred_region
      %s1021 = ssub.s32 1024, 1024
      %1022 = vsyncadd [#allocation9], %s1021
      %s1023 = sshll.u32 [#allocation8], 4
      %s1024 = int_to_ptr.vmem [resolvable:$true] %s1023
      %1029 = dma.vmem_to_hbm [thread:$0]  %s1024, 1024, %s4, [#allocation9], 128, 128, 8
    $region29: #{tpu_custom_call.1} parent=1 // pred_fallthru
      _
    // Predicated region
    $region30: #{tpu_custom_call.1} parent=1 // pred_check
      _
    $region31: #{tpu_custom_call.1} parent=1 // pred_check_branch
      %1031 = sbr.rel (0) target = $region33
    $region32: #{tpu_custom_call.1} parent=1 // pred_region
      %1032 = dma.done [#allocation4], 1024
    $region33: #{tpu_custom_call.1} parent=1 // pred_fallthru
      _
    // Predicated region
    $region34: #{tpu_custom_call.1} parent=1 // pred_check
      _
    $region35: #{tpu_custom_call.1} parent=1 // pred_check_branch
      %1034 = sbr.rel (0) target = $region37
    $region36: #{tpu_custom_call.1} parent=1 // pred_region
      %1035 = dma.done [#allocation9], 1024
    $region37: #{tpu_custom_call.1} parent=1 // pred_fallthru
      _
    %1036 = vsyncpa [#allocation3], 1
    %1037 = vsyncpa [#allocation6], 1
    %1038 = vsyncpa [#allocation4], 1
    %1039 = vsyncpa [#allocation9], 1

</llo_original>
